<compile_context>
chip_gen: v6e
topology: v6e:2x2x1
jax: 0.10.0
libtpu: 0.0.40
codegen_flags: <defaults>
</compile_context>

<pallas_src>
import jax
import jax.numpy as jnp
from jax import lax
from jax.experimental import pallas as pl
from jax.experimental.pallas import tpu as pltpu


# One-hot MXU path only while the contraction dim (num_users) stays cheap.
_ONEHOT_MAX_USERS = 2048
# Conservative "table fits VMEM" budget (v7x has only 64 MiB VMEM per TC).
_TABLE_VMEM_BUDGET = 40 * 1024 * 1024
# Above this size, single-buffer the grid-invariant table block.
_SINGLE_BUFFER_TABLE_BYTES = 4 * 1024 * 1024


def _round_up(x, m):
    return (x + m - 1) // m * m


def _onehot_gather_kernel(idx_ref, table_ref, out_ref):
    """idx_ref: VMEM (tile_rows, 1) int32 ids; table_ref: VMEM (num_users, dim)
    grid-invariant resident table; out_ref: VMEM (tile_rows, dim) output block."""
    tile_rows = out_ref.shape[0]
    num_users = table_ref.shape[0]

    ids = idx_ref[...]                                                # (tile_rows, 1) i32
    user_iota = lax.broadcasted_iota(jnp.int32, (tile_rows, num_users), 1)
    table = table_ref[...]
    onehot = (ids == user_iota).astype(table.dtype)                   # exact {0,1}

    # One-hot x table == row gather. HIGHEST precision keeps f32 tables exact
    # (multi-pass bf16 decomposition; the one-hot operand is exact in bf16).
    gathered = jnp.dot(
        onehot,
        table,
        preferred_element_type=jnp.float32,
        precision=lax.Precision.HIGHEST,
    )
    out_ref[...] = gathered.astype(out_ref.dtype)


def user_embedding_lookup(user_inputs, embedding_table, *, tile_n=512):
    """Equivalent of UserEmbeddingLayer.forward: embedding_table[user_inputs]."""
    num_users, embedding_dim = embedding_table.shape
    out_dtype = embedding_table.dtype
    in_shape = user_inputs.shape

    flat_idx = user_inputs.reshape(-1).astype(jnp.int32)
    # nn.Embedding raises on out-of-range ids; we clamp instead (documented choice).
    flat_idx = jnp.clip(flat_idx, 0, num_users - 1)
    n = int(flat_idx.shape[0])

    itemsize = jnp.dtype(out_dtype).itemsize
    table_bytes = num_users * embedding_dim * itemsize

    if num_users > _ONEHOT_MAX_USERS or table_bytes > _TABLE_VMEM_BUDGET:
        # TODO(synk): manual HBM DMA-gather Pallas kernel for huge tables; use the
        # XLA gather meanwhile so semantics are preserved at any size.
        flat_out = jnp.take(embedding_table, flat_idx, axis=0)
        return flat_out.reshape(*in_shape, embedding_dim)

    # Row tile: >= 8 (sublane-dense stores), <= tile_n, and small enough that the
    # grid has at least 2 steps so both v7x TensorCores get work.
    tile_rows = max(8, min(int(tile_n), _round_up(pl.cdiv(n, 2), 8)))
    grid = (pl.cdiv(n, tile_rows),)

    idx_2d = flat_idx.reshape(n, 1)

    table_spec_kwargs = {}
    table_copies = 2
    if table_bytes >= _SINGLE_BUFFER_TABLE_BYTES:
        # Grid-invariant block: no need to double-buffer it (halves its VMEM
        # footprint; matters most on v7x's 64 MiB VMEM).
        table_spec_kwargs["pipeline_mode"] = pl.Buffered(1)
        table_copies = 1

    in_specs = [
        pl.BlockSpec((tile_rows, 1), lambda i: (i, 0)),                 # ids tile
        pl.BlockSpec((num_users, embedding_dim), lambda i: (0, 0),      # resident table
                     **table_spec_kwargs),
    ]
    out_spec = pl.BlockSpec((tile_rows, embedding_dim), lambda i: (i, 0))

    # VMEM budget: table (+copies), double-buffered out/idx blocks, one-hot temp,
    # plus headroom. Never set the limit below the 32 MiB default scoped value.
    out_block_bytes = tile_rows * embedding_dim * itemsize
    onehot_bytes = tile_rows * num_users * 4
    vmem_needed = (table_copies * table_bytes + 2 * out_block_bytes
                   + 2 * tile_rows * 4 + onehot_bytes + (4 << 20))
    vmem_limit = int(min(max(vmem_needed, 32 << 20), 100 << 20))

    bytes_accessed = table_bytes + n * 4 + n * embedding_dim * itemsize

    flat_out = pl.pallas_call(
        _onehot_gather_kernel,
        out_shape=jax.ShapeDtypeStruct((n, embedding_dim), out_dtype),
        grid=grid,
        in_specs=in_specs,
        out_specs=out_spec,
        compiler_params=pltpu.CompilerParams(
            dimension_semantics=("parallel",),
            vmem_limit_bytes=vmem_limit,
        ),
        cost_estimate=pl.CostEstimate(
            flops=2 * n * num_users * embedding_dim,
            transcendentals=0,
            bytes_accessed=int(bytes_accessed),
        ),
    )(idx_2d, embedding_table)

    return flat_out.reshape(*in_shape, embedding_dim)


if __name__ == "__main__":
    # Small deterministic setup consistent with UserEmbeddingLayer(num_users, embedding_dim).
    num_users = 64
    embedding_dim = 128   # lane-aligned embedding width
    batch, seq = 2, 8

    key = jax.random.PRNGKey(0)
    k_table, k_idx = jax.random.split(key)

    # Stand-in for nn.Embedding.weight ~ N(0, 1).
    embedding_table = jax.random.normal(
        k_table, (num_users, embedding_dim), dtype=jnp.float32
    )
    user_inputs = jax.random.randint(k_idx, (batch, seq), 0, num_users, dtype=jnp.int32)

    out = user_embedding_lookup(user_inputs, embedding_table)
    out = jax.block_until_ready(out)

    # Reference: plain JAX gather (== PyTorch nn.Embedding forward).
    ref = jnp.take(embedding_table, user_inputs, axis=0)
    assert out.shape == (batch, seq, embedding_dim), out.shape
    assert jnp.allclose(out, ref, rtol=1e-5, atol=1e-5), "mismatch vs reference gather"

    print("KERNEL_OK")
</pallas_src>

<mosaic_0001>
module attributes {stable_mosaic.version = 11 : i64} {
  func.func @_onehot_gather_kernel(%arg0: i32, %arg1: memref<8x1xi32, #tpu.memory_space<vmem>>, %arg2: memref<64x128xf32, #tpu.memory_space<vmem>>, %arg3: memref<8x128xf32, #tpu.memory_space<vmem>>) attributes {dimension_semantics = [#tpu.dimension_semantics<parallel>], iteration_bounds = array<i64: 2>, scalar_prefetch = 0 : i64, scratch_operands = 0 : i64, tpu.core_type = #tpu.core_type<tc>, window_params = [{transform_indices = @transform_0, window_bounds = array<i64: 8, 1>}, {pipeline_mode = #tpu.pipeline_mode<synchronous>, transform_indices = @transform_1, window_bounds = array<i64: 64, 128>}, {transform_indices = @transform_2, window_bounds = array<i64: 8, 128>}]} {
    %c0 = arith.constant 0 : index
    %c0_0 = arith.constant 0 : index
    %0 = vector.load %arg1[%c0, %c0_0] : memref<8x1xi32, #tpu.memory_space<vmem>>, vector<8x1xi32>
    %1 = tpu.iota {dimensions = array<i32: 1>} : vector<8x64xi32>
    %c0_1 = arith.constant 0 : index
    %c0_2 = arith.constant 0 : index
    %2 = vector.load %arg2[%c0_1, %c0_2] : memref<64x128xf32, #tpu.memory_space<vmem>>, vector<64x128xf32>
    %3 = vector.broadcast %0 : vector<8x1xi32> to vector<8x64xi32>
    %4 = arith.cmpi eq, %3, %1 : vector<8x64xi32>
    %5 = arith.extui %4 : vector<8x64xi1> to vector<8x64xi32>
    %6 = arith.sitofp %5 : vector<8x64xi32> to vector<8x64xf32>
    %cst = arith.constant dense<0.000000e+00> : vector<8x128xf32>
    %7 = tpu.matmul %6, %2, %cst {dimension_numbers = #tpu.dot_dimension_numbers<[1], [0], [0], [1], [0, 0, 1, 1], [], []>, precision = #tpu.contract_precision<fp32>} : vector<8x64xf32>, vector<64x128xf32>, vector<8x128xf32> -> vector<8x128xf32>
    %c0_3 = arith.constant 0 : index
    %c0_4 = arith.constant 0 : index
    %8 = vector.load %arg3[%c0_3, %c0_4] : memref<8x128xf32, #tpu.memory_space<vmem>>, vector<8x128xf32>
    tpu.vector_store %arg3[%c0_3, %c0_4], %7 {strides = array<i32>} : memref<8x128xf32, #tpu.memory_space<vmem>>, vector<8x128xf32>,
    return
  }
  func.func @transform_0(%arg0: i32) -> (i32, i32) {
    %c0_i32 = arith.constant 0 : i32
    %c0_i32_0 = arith.constant 0 : i32
    return %arg0, %c0_i32 : i32, i32
  }
  func.func @transform_1(%arg0: i32) -> (i32, i32) {
    %c0_i32 = arith.constant 0 : i32
    %c0_i32_0 = arith.constant 0 : i32
    %c0_i32_1 = arith.constant 0 : i32
    return %c0_i32, %c0_i32_0 : i32, i32
  }
  func.func @transform_2(%arg0: i32) -> (i32, i32) {
    %c0_i32 = arith.constant 0 : i32
    %c0_i32_0 = arith.constant 0 : i32
    return %arg0, %c0_i32 : i32, i32
  }
}

</mosaic_0001>

<llo_original>
// kernel: tpu_custom_call.1
$region0: #{tpu_custom_call.1}
  #allocation0 [shape = 'u32[]', space=smem, size = 0x4, offset = 0x4, fixed_abs, tag = 'smem constant byte address 0x4 - core index']
  #allocation1 [shape = 'u32[144,128]{1,0:T(1,128)}', space=vmem, size = 0x12000, scoped, tag = 'internal scratch']
  %s0 = inlined_call_operand.vmem [shape: s32[16,1], index: 0, kind: input, shape index: {}]
  %s1 = inlined_call_operand.hbm [shape: f32[64,128], index: 1, kind: input, shape index: {}]
  %s2 = inlined_call_operand.hbm [shape: f32[16,128], index: 2, kind: output, shape index: {}]
  %s3 = sld [smem:[#allocation0]]
  $region45: #{tpu_custom_call.1} parent=0
    _
  %s5 = ssub.s32 1, %s3
  %s6 = scalar_select 0, %s5, %s3
  $region1: #{tpu_custom_call.1} parent=0
    #allocation2 [shape = 'u8[32768]{0}', space=vmem, size = 0x8000, scoped, tag = 'input window, operand 1, single buffered']
    #allocation3 [shape = 's32[2]{0}', space=sflag, size = 0x8, scoped, tag = 'scoped memory for tpu_custom_call.1']
    #allocation4 [shape = 's32[2]{0}', space=sflag, size = 0x8, scoped, tag = 'scoped memory for tpu_custom_call.1']
    #allocation5 [shape = 'u8[8192]{0}', space=vmem, size = 0x2000, scoped, tag = 'output window, operand 0']
    %7 = vsyncpa [#allocation3], 0
    %8 = vsyncpa [#allocation4], 0
    %s9 = scalar_lea.sflag [#allocation4], 1
    %10 = vsyncpa %s9, 0
    loop: start=0, step=1, limit=4
    $region2: #{tpu_custom_call.1} parent=1 // loop_pre_header
      _
    $region3: #{tpu_custom_call.1} parent=1 // loop_header
      %s12 = sphi 0, %s16
      %p13 = scmp.ge.s32.totalorder %s12, 4
      %s22 = sphi 0, %s24
      %s25 = sphi 0, %s22
      %s26 = sphi 0, %s25
      %s42 = sphi 0, %s26
      %s46 = sphi 0, %s46
      %s48 = sphi 0, %s46
      %s49 = sphi 0, %s48
      %s63 = sphi 0, %s49
      %s69 = sphi 0, %s71
      %s72 = sphi 0, %s69
      %s73 = sphi 0, %s72
      %s89 = sphi 0, %s73
    $region4: #{tpu_custom_call.1} parent=1 // loop_header_branch
      %15 = sbr.rel (%p13) target = $region8
    $region5: #{tpu_custom_call.1} parent=1 // loop_body
      %s17 = ssub.s32 %s12, 1
      %s18 = ssub.s32 %s12, 2
      %s19 = sadd.s32 %s12, 1
      %s20 = ssub.s32 %s12, %s19
      %p21 = scmp.eq.s32.totalorder %s20, 0
      %s23 = sadd.s32 %s22, 1
      %s24 = scalar_select %p21, %s22, %s23
      %p27 = pneg %p21
      %p28 = scmp.eq.s32.totalorder %s12, 1
      %p29 = por %p27, %p28
      %p30 = scmp.ne.s32.totalorder %s22, %s25
      %p31 = scmp.eq.s32.totalorder %s12, 0
      %p32 = por %p30, %p31
      %p33 = scmp.ne.s32.totalorder %s22, %s25
      %p34 = scmp.eq.s32.totalorder %s17, 1
      %p35 = por %p33, %p34
      %p36 = scmp.ne.s32.totalorder %s25, %s26
      %p37 = scmp.eq.s32.totalorder %s17, 0
      %p38 = por %p36, %p37
      %p39 = scmp.ne.s32.totalorder %s25, %s26
      %p40 = scmp.eq.s32.totalorder %s18, 1
      %p41 = por %p39, %p40
      %p43 = scmp.ne.s32.totalorder %s26, %s42
      %p44 = scmp.eq.s32.totalorder %s18, 0
      %p45 = por %p43, %p44
      %s47 = sadd.s32 %s46, 1
      %p50 = scmp.eq.s32.totalorder %s12, 1
      %p51 = scmp.ne.s32.totalorder %s46, %s48
      %p52 = scmp.eq.s32.totalorder %s12, 0
      %p53 = por %p51, %p52
      %p54 = scmp.ne.s32.totalorder %s46, %s48
      %p55 = scmp.eq.s32.totalorder %s17, 1
      %p56 = por %p54, %p55
      %p57 = scmp.ne.s32.totalorder %s48, %s49
      %p58 = scmp.eq.s32.totalorder %s17, 0
      %p59 = por %p57, %p58
      %p60 = scmp.ne.s32.totalorder %s48, %s49
      %p61 = scmp.eq.s32.totalorder %s18, 1
      %p62 = por %p60, %p61
      %p64 = scmp.ne.s32.totalorder %s49, %s63
      %p65 = scmp.eq.s32.totalorder %s18, 0
      %p66 = por %p64, %p65
      %s67 = ssub.s32 %s12, %s19
      %p68 = scmp.eq.s32.totalorder %s67, 0
      %s70 = sadd.s32 %s69, 1
      %s71 = scalar_select %p68, %s69, %s70
      %p74 = pneg %p68
      %p75 = scmp.eq.s32.totalorder %s12, 1
      %p76 = por %p74, %p75
      %p77 = scmp.ne.s32.totalorder %s69, %s72
      %p78 = scmp.eq.s32.totalorder %s12, 0
      %p79 = por %p77, %p78
      %p80 = scmp.ne.s32.totalorder %s69, %s72
      %p81 = scmp.eq.s32.totalorder %s17, 1
      %p82 = por %p80, %p81
      %p83 = scmp.ne.s32.totalorder %s72, %s73
      %p84 = scmp.eq.s32.totalorder %s17, 0
      %p85 = por %p83, %p84
      %p86 = scmp.ne.s32.totalorder %s72, %s73
      %p87 = scmp.eq.s32.totalorder %s18, 1
      %p88 = por %p86, %p87
      %p90 = scmp.ne.s32.totalorder %s73, %s89
      %p91 = scmp.eq.s32.totalorder %s18, 0
      %p92 = por %p90, %p91
      %p93 = scmp.le.s32.totalorder 1, %s12
      %p94 = scmp.lt.s32.totalorder %s12, 3
      %p95 = pnand %p93, %p94
      %p96 = pneg %p95
      // Predicated region
      $region9: #{tpu_custom_call.1} parent=5 // pred_check
        _
      $region10: #{tpu_custom_call.1} parent=5 // pred_check_branch
        %98 = sbr.rel (%p95) target = $region12
      $region11: #{tpu_custom_call.1} parent=5 // pred_region
        %s99 = ssub.s32 %s12, 1
        // Predicated region
        $region13: #{tpu_custom_call.1} parent=11 // pred_check
          %p100 = pneg %p59
        $region14: #{tpu_custom_call.1} parent=11 // pred_check_branch
          %102 = sbr.rel (%p100) target = $region16
        $region15: #{tpu_custom_call.1} parent=11 // pred_region
          %s104 = ssub.s32 1024, 1024
          %105 = vsyncadd [#allocation3], %s104
          %s106 = sshll.u32 [#allocation2], 4
          %s107 = int_to_ptr.vmem [resolvable:$true] %s106
          %112 = dma.hbm_to_vmem [thread:$0]  %s1, 1024, %s107, [#allocation3], 128, 128, 8
        $region16: #{tpu_custom_call.1} parent=11 // pred_fallthru
          _
      $region12: #{tpu_custom_call.1} parent=5 // pred_fallthru
        _
      %p113 = scmp.lt.s32.totalorder %s12, 2
      // Predicated region
      $region17: #{tpu_custom_call.1} parent=5 // pred_check
        %p114 = pneg %p113
      $region18: #{tpu_custom_call.1} parent=5 // pred_check_branch
        %116 = sbr.rel (%p114) target = $region20
      $region19: #{tpu_custom_call.1} parent=5 // pred_region
        // Predicated region
        $region21: #{tpu_custom_call.1} parent=19 // pred_check
          %p117 = pneg %p32
        $region22: #{tpu_custom_call.1} parent=19 // pred_check_branch
          %119 = sbr.rel (%p117) target = $region24
        $region23: #{tpu_custom_call.1} parent=19 // pred_region
          %p120 = scmp.lt.s32.totalorder %s12, 1
          %s121 = scalar_select %p120, %s12, 1
          %s122 = smul.addr %s121, 8
          %s123 = scalar_lea.vmem %s0, %s122
        $region24: #{tpu_custom_call.1} parent=19 // pred_fallthru
          _
      $region20: #{tpu_custom_call.1} parent=5 // pred_fallthru
        _
      %p124 = scmp.le.s32.totalorder 1, %s12
      %p125 = scmp.lt.s32.totalorder %s12, 3
      %p126 = pnand %p124, %p125
      %p127 = pneg %p126
      // Predicated region
      $region25: #{tpu_custom_call.1} parent=5 // pred_check
        _
      $region26: #{tpu_custom_call.1} parent=5 // pred_check_branch
        %129 = sbr.rel (%p126) target = $region28
      $region27: #{tpu_custom_call.1} parent=5 // pred_region
        %s130 = ssub.s32 %s12, 1
        // Predicated region
        $region29: #{tpu_custom_call.1} parent=27 // pred_check
          %p131 = pneg %p59
        $region30: #{tpu_custom_call.1} parent=27 // pred_check_branch
          %133 = sbr.rel (%p131) target = $region32
        $region31: #{tpu_custom_call.1} parent=27 // pred_region
          %134 = dma.done [#allocation3], 1024
        $region32: #{tpu_custom_call.1} parent=27 // pred_fallthru
          _
        %p135 = scmp.lt.s32.totalorder %s17, 1
        %s136 = scalar_select %p135, %s17, 1
        %s137 = smul.addr %s136, 8
        %s138 = scalar_lea.vmem %s0, %s137
        %p139 = pneg %p38
        %p140 = pneg %p35
        %p141 = pneg %p59
        %p142 = pneg %p56
        %p143 = pneg %p85
        %p144 = pneg %p82
        %s145 = sand.u32 %s72, 1
        %s146 = scalar_lea.sflag [#allocation4], %s145
        %s147 = sand.u32 %s72, 1
        %s148 = smul.addr %s147, 8
        %s149 = scalar_lea.vmem [#allocation5], %s148
        %p150 = scmp.lt.s32.totalorder %s17, 1
        %s151 = scalar_select %p150, %s17, 1
        %s152 = smul.addr %s151, 8
        %s153 = scalar_lea.vmem %s0, %s152
        %v154 = vld [vmem:[%s153] sm:$0xff]
        %v155 = vlaneseq
        %v156 = vand.u32 %v155, 127
        %v157 = vld [vmem:[#allocation2] sm:$0xff]
        %v158 = vld [vmem:[#allocation2 + $0x8] sm:$0xff]
        %v159 = vld [vmem:[#allocation2 + $0x10] sm:$0xff]
        %v160 = vld [vmem:[#allocation2 + $0x18] sm:$0xff]
        %v161 = vld [vmem:[#allocation2 + $0x20] sm:$0xff]
        %v162 = vld [vmem:[#allocation2 + $0x28] sm:$0xff]
        %v163 = vld [vmem:[#allocation2 + $0x30] sm:$0xff]
        %v164 = vld [vmem:[#allocation2 + $0x38] sm:$0xff]
        %165 = vset.pattern.permute.xlu0 0
        %166 = vperm.xlu0 %165, %v154
        %v167 = vpop.permute.xlu0 %166
        %vm168 = vcmp.eq.s32.totalorder %v167, %v156
        %v169 = vsel %vm168, 1, 0
        %v170 = vcvt.s32.f32 %v169
        %vm171 = vcmask 523264
        %v173 = vsel %vm171, %v170, 0
        %175 = vmatprep.subr.mxu0 0.0
        %176 = vmatpush1.msra.mxu0 0.0
        %177 = vmatprep.subr.mxu0 0.0
        %178 = vmatpush1.msra.mxu0 0.0
        %179 = vmatprep.subr.mxu0 0.0
        %180 = vmatpush1.msra.mxu0 0.0
        %181 = vmatprep.subr.mxu0 0.0
        %182 = vmatpush1.msra.mxu0 0.0
        %183 = vmatprep.subr.mxu0 0.0
        %184 = vmatpush1.msra.mxu0 0.0
        %185 = vmatprep.subr.mxu0 0.0
        %186 = vmatpush1.msra.mxu0 0.0
        %187 = vmatprep.subr.mxu0 0.0
        %188 = vmatpush1.msra.mxu0 0.0
        %189 = vmatprep.subr.mxu0 0.0
        %190 = vmatpush1.msra.mxu0 0.0
        %191 = vmatprep.subr.mxu0 0.0
        %v192 = vand.u32 %v164, 4294901760
        %193 = vmatpush1.msra.mxu0 %v192
        %194 = vmatprep.subr.mxu0 0.0
        %v195 = vand.u32 %v163, 4294901760
        %196 = vmatpush1.msra.mxu0 %v195
        %197 = vmatprep.subr.mxu0 0.0
        %v198 = vand.u32 %v162, 4294901760
        %199 = vmatpush1.msra.mxu0 %v198
        %200 = vmatprep.subr.mxu0 0.0
        %v201 = vand.u32 %v161, 4294901760
        %202 = vmatpush1.msra.mxu0 %v201
        %203 = vmatprep.subr.mxu0 0.0
        %v204 = vand.u32 %v160, 4294901760
        %205 = vmatpush1.msra.mxu0 %v204
        %206 = vmatprep.subr.mxu0 0.0
        %v207 = vand.u32 %v159, 4294901760
        %208 = vmatpush1.msra.mxu0 %v207
        %209 = vmatprep.subr.mxu0 0.0
        %v210 = vand.u32 %v158, 4294901760
        %211 = vmatpush1.msra.mxu0 %v210
        %212 = vmatprep.subr.mxu0 0.0
        %v213 = vand.u32 %v157, 4294901760
        %214 = vmatpush1.msra.mxu0 %v213
        %215 = vmatprep.subr.mxu0 0.0
        %216 = vmatpush2.msra.mxu0 0.0
        %217 = vmatprep.subr.mxu0 0.0
        %218 = vmatpush2.msra.mxu0 0.0
        %219 = vmatprep.subr.mxu0 0.0
        %220 = vmatpush2.msra.mxu0 0.0
        %221 = vmatprep.subr.mxu0 0.0
        %222 = vmatpush2.msra.mxu0 0.0
        %223 = vmatprep.subr.mxu0 0.0
        %224 = vmatpush2.msra.mxu0 0.0
        %225 = vmatprep.subr.mxu0 0.0
        %226 = vmatpush2.msra.mxu0 0.0
        %227 = vmatprep.subr.mxu0 0.0
        %228 = vmatpush2.msra.mxu0 0.0
        %229 = vmatprep.subr.mxu0 0.0
        %230 = vmatpush2.msra.mxu0 0.0
        %231 = vmatprep.subr.mxu0 0.0
        %232 = vmatpush2.msra.mxu0 0.0
        %233 = vmatprep.subr.mxu0 0.0
        %234 = vmatpush2.msra.mxu0 0.0
        %235 = vmatprep.subr.mxu0 0.0
        %236 = vmatpush2.msra.mxu0 0.0
        %237 = vmatprep.subr.mxu0 0.0
        %238 = vmatpush2.msra.mxu0 0.0
        %239 = vmatprep.subr.mxu0 0.0
        %240 = vmatpush2.msra.mxu0 0.0
        %241 = vmatprep.subr.mxu0 0.0
        %242 = vmatpush2.msra.mxu0 0.0
        %243 = vmatprep.subr.mxu0 0.0
        %244 = vmatpush2.msra.mxu0 0.0
        %245 = vmatprep.subr.mxu0 0.0
        %246 = vmatpush2.msra.mxu0 0.0
        %247 = vmatprep.mubr.f32.mxu0 0.0
        %v248 = vand.u32 %v173, 4294901760
        %v249 = vsub.f32 %v173, %v248
        %v250 = vand.u32 %v249, 4294901760
        %v251 = vsub.f32 %v249, %v250
        %v252 = vand.u32 %v251, 4294901760
        %253 = vmatmul.mubr.f32.gmra.mxu0 %v252
        %v254 = vpop.f32.mrf.mxu0
        %v255 = vadd.f32 0.0, %v254
        %v256 = vpop.f32.mrf.mxu0
        %257 = vdwg.mxu0
        %258 = vmatprep.subr.mxu0 0.0
        %259 = vmatpush1.msra.mxu0 0.0
        %260 = vmatprep.subr.mxu0 0.0
        %261 = vmatpush1.msra.mxu0 0.0
        %262 = vmatprep.subr.mxu0 0.0
        %263 = vmatpush1.msra.mxu0 0.0
        %264 = vmatprep.subr.mxu0 0.0
        %265 = vmatpush1.msra.mxu0 0.0
        %266 = vmatprep.subr.mxu0 0.0
        %267 = vmatpush1.msra.mxu0 0.0
        %268 = vmatprep.subr.mxu0 0.0
        %269 = vmatpush1.msra.mxu0 0.0
        %270 = vmatprep.subr.mxu0 0.0
        %271 = vmatpush1.msra.mxu0 0.0
        %272 = vmatprep.subr.mxu0 0.0
        %273 = vmatpush1.msra.mxu0 0.0
        %274 = vmatprep.subr.mxu0 0.0
        %v275 = vand.u32 %v164, 4294901760
        %v276 = vsub.f32 %v164, %v275
        %v277 = vand.u32 %v276, 4294901760
        %v278 = vsub.f32 %v276, %v277
        %v279 = vand.u32 %v278, 4294901760
        %280 = vmatpush1.msra.mxu0 %v279
        %281 = vmatprep.subr.mxu0 0.0
        %v282 = vand.u32 %v163, 4294901760
        %v283 = vsub.f32 %v163, %v282
        %v284 = vand.u32 %v283, 4294901760
        %v285 = vsub.f32 %v283, %v284
        %v286 = vand.u32 %v285, 4294901760
        %287 = vmatpush1.msra.mxu0 %v286
        %288 = vmatprep.subr.mxu0 0.0
        %v289 = vand.u32 %v162, 4294901760
        %v290 = vsub.f32 %v162, %v289
        %v291 = vand.u32 %v290, 4294901760
        %v292 = vsub.f32 %v290, %v291
        %v293 = vand.u32 %v292, 4294901760
        %294 = vmatpush1.msra.mxu0 %v293
        %295 = vmatprep.subr.mxu0 0.0
        %v296 = vand.u32 %v161, 4294901760
        %v297 = vsub.f32 %v161, %v296
        %v298 = vand.u32 %v297, 4294901760
        %v299 = vsub.f32 %v297, %v298
        %v300 = vand.u32 %v299, 4294901760
        %301 = vmatpush1.msra.mxu0 %v300
        %302 = vmatprep.subr.mxu0 0.0
        %v303 = vand.u32 %v160, 4294901760
        %v304 = vsub.f32 %v160, %v303
        %v305 = vand.u32 %v304, 4294901760
        %v306 = vsub.f32 %v304, %v305
        %v307 = vand.u32 %v306, 4294901760
        %308 = vmatpush1.msra.mxu0 %v307
        %309 = vmatprep.subr.mxu0 0.0
        %v310 = vand.u32 %v159, 4294901760
        %v311 = vsub.f32 %v159, %v310
        %v312 = vand.u32 %v311, 4294901760
        %v313 = vsub.f32 %v311, %v312
        %v314 = vand.u32 %v313, 4294901760
        %315 = vmatpush1.msra.mxu0 %v314
        %316 = vmatprep.subr.mxu0 0.0
        %v317 = vand.u32 %v158, 4294901760
        %v318 = vsub.f32 %v158, %v317
        %v319 = vand.u32 %v318, 4294901760
        %v320 = vsub.f32 %v318, %v319
        %v321 = vand.u32 %v320, 4294901760
        %322 = vmatpush1.msra.mxu0 %v321
        %323 = vmatprep.subr.mxu0 0.0
        %v324 = vand.u32 %v157, 4294901760
        %v325 = vsub.f32 %v157, %v324
        %v326 = vand.u32 %v325, 4294901760
        %v327 = vsub.f32 %v325, %v326
        %v328 = vand.u32 %v327, 4294901760
        %329 = vmatpush1.msra.mxu0 %v328
        %330 = vmatprep.subr.mxu0 0.0
        %331 = vmatpush2.msra.mxu0 0.0
        %332 = vmatprep.subr.mxu0 0.0
        %333 = vmatpush2.msra.mxu0 0.0
        %334 = vmatprep.subr.mxu0 0.0
        %335 = vmatpush2.msra.mxu0 0.0
        %336 = vmatprep.subr.mxu0 0.0
        %337 = vmatpush2.msra.mxu0 0.0
        %338 = vmatprep.subr.mxu0 0.0
        %339 = vmatpush2.msra.mxu0 0.0
        %340 = vmatprep.subr.mxu0 0.0
        %341 = vmatpush2.msra.mxu0 0.0
        %342 = vmatprep.subr.mxu0 0.0
        %343 = vmatpush2.msra.mxu0 0.0
        %344 = vmatprep.subr.mxu0 0.0
        %345 = vmatpush2.msra.mxu0 0.0
        %346 = vmatprep.subr.mxu0 0.0
        %347 = vmatpush2.msra.mxu0 0.0
        %348 = vmatprep.subr.mxu0 0.0
        %349 = vmatpush2.msra.mxu0 0.0
        %350 = vmatprep.subr.mxu0 0.0
        %351 = vmatpush2.msra.mxu0 0.0
        %352 = vmatprep.subr.mxu0 0.0
        %353 = vmatpush2.msra.mxu0 0.0
        %354 = vmatprep.subr.mxu0 0.0
        %355 = vmatpush2.msra.mxu0 0.0
        %356 = vmatprep.subr.mxu0 0.0
        %357 = vmatpush2.msra.mxu0 0.0
        %358 = vmatprep.subr.mxu0 0.0
        %359 = vmatpush2.msra.mxu0 0.0
        %360 = vmatprep.subr.mxu0 0.0
        %361 = vmatpush2.msra.mxu0 0.0
        %362 = vmatprep.mubr.f32.mxu0 0.0
        %v363 = vand.u32 %v173, 4294901760
        %364 = vmatmul.mubr.f32.gmra.mxu0 %v363
        %v365 = vpop.f32.mrf.mxu0
        %v366 = vadd.f32 %v255, %v365
        %v367 = vpop.f32.mrf.mxu0
        %368 = vdwg.mxu0
        %369 = vmatprep.subr.mxu0 0.0
        %370 = vmatpush1.msra.mxu0 0.0
        %371 = vmatprep.subr.mxu0 0.0
        %372 = vmatpush1.msra.mxu0 0.0
        %373 = vmatprep.subr.mxu0 0.0
        %374 = vmatpush1.msra.mxu0 0.0
        %375 = vmatprep.subr.mxu0 0.0
        %376 = vmatpush1.msra.mxu0 0.0
        %377 = vmatprep.subr.mxu0 0.0
        %378 = vmatpush1.msra.mxu0 0.0
        %379 = vmatprep.subr.mxu0 0.0
        %380 = vmatpush1.msra.mxu0 0.0
        %381 = vmatprep.subr.mxu0 0.0
        %382 = vmatpush1.msra.mxu0 0.0
        %383 = vmatprep.subr.mxu0 0.0
        %384 = vmatpush1.msra.mxu0 0.0
        %385 = vmatprep.subr.mxu0 0.0
        %v386 = vand.u32 %v164, 4294901760
        %v387 = vsub.f32 %v164, %v386
        %388 = vmatpush1.msra.mxu0 %v387
        %389 = vmatprep.subr.mxu0 0.0
        %v390 = vand.u32 %v163, 4294901760
        %v391 = vsub.f32 %v163, %v390
        %392 = vmatpush1.msra.mxu0 %v391
        %393 = vmatprep.subr.mxu0 0.0
        %v394 = vand.u32 %v162, 4294901760
        %v395 = vsub.f32 %v162, %v394
        %396 = vmatpush1.msra.mxu0 %v395
        %397 = vmatprep.subr.mxu0 0.0
        %v398 = vand.u32 %v161, 4294901760
        %v399 = vsub.f32 %v161, %v398
        %400 = vmatpush1.msra.mxu0 %v399
        %401 = vmatprep.subr.mxu0 0.0
        %v402 = vand.u32 %v160, 4294901760
        %v403 = vsub.f32 %v160, %v402
        %404 = vmatpush1.msra.mxu0 %v403
        %405 = vmatprep.subr.mxu0 0.0
        %v406 = vand.u32 %v159, 4294901760
        %v407 = vsub.f32 %v159, %v406
        %408 = vmatpush1.msra.mxu0 %v407
        %409 = vmatprep.subr.mxu0 0.0
        %v410 = vand.u32 %v158, 4294901760
        %v411 = vsub.f32 %v158, %v410
        %412 = vmatpush1.msra.mxu0 %v411
        %413 = vmatprep.subr.mxu0 0.0
        %v414 = vand.u32 %v157, 4294901760
        %v415 = vsub.f32 %v157, %v414
        %416 = vmatpush1.msra.mxu0 %v415
        %417 = vmatprep.subr.mxu0 0.0
        %418 = vmatpush2.msra.mxu0 0.0
        %419 = vmatprep.subr.mxu0 0.0
        %420 = vmatpush2.msra.mxu0 0.0
        %421 = vmatprep.subr.mxu0 0.0
        %422 = vmatpush2.msra.mxu0 0.0
        %423 = vmatprep.subr.mxu0 0.0
        %424 = vmatpush2.msra.mxu0 0.0
        %425 = vmatprep.subr.mxu0 0.0
        %426 = vmatpush2.msra.mxu0 0.0
        %427 = vmatprep.subr.mxu0 0.0
        %428 = vmatpush2.msra.mxu0 0.0
        %429 = vmatprep.subr.mxu0 0.0
        %430 = vmatpush2.msra.mxu0 0.0
        %431 = vmatprep.subr.mxu0 0.0
        %432 = vmatpush2.msra.mxu0 0.0
        %433 = vmatprep.subr.mxu0 0.0
        %434 = vmatpush2.msra.mxu0 0.0
        %435 = vmatprep.subr.mxu0 0.0
        %436 = vmatpush2.msra.mxu0 0.0
        %437 = vmatprep.subr.mxu0 0.0
        %438 = vmatpush2.msra.mxu0 0.0
        %439 = vmatprep.subr.mxu0 0.0
        %440 = vmatpush2.msra.mxu0 0.0
        %441 = vmatprep.subr.mxu0 0.0
        %442 = vmatpush2.msra.mxu0 0.0
        %443 = vmatprep.subr.mxu0 0.0
        %444 = vmatpush2.msra.mxu0 0.0
        %445 = vmatprep.subr.mxu0 0.0
        %446 = vmatpush2.msra.mxu0 0.0
        %447 = vmatprep.subr.mxu0 0.0
        %448 = vmatpush2.msra.mxu0 0.0
        %449 = vmatprep.mubr.f32.mxu0 0.0
        %v450 = vand.u32 %v173, 4294901760
        %v451 = vsub.f32 %v173, %v450
        %452 = vmatmul.mubr.f32.gmra.mxu0 %v451
        %v453 = vpop.f32.mrf.mxu0
        %v454 = vadd.f32 %v366, %v453
        %v455 = vpop.f32.mrf.mxu0
        %456 = vdwg.mxu0
        %457 = vmatprep.subr.mxu0 0.0
        %458 = vmatpush1.msra.mxu0 0.0
        %459 = vmatprep.subr.mxu0 0.0
        %460 = vmatpush1.msra.mxu0 0.0
        %461 = vmatprep.subr.mxu0 0.0
        %462 = vmatpush1.msra.mxu0 0.0
        %463 = vmatprep.subr.mxu0 0.0
        %464 = vmatpush1.msra.mxu0 0.0
        %465 = vmatprep.subr.mxu0 0.0
        %466 = vmatpush1.msra.mxu0 0.0
        %467 = vmatprep.subr.mxu0 0.0
        %468 = vmatpush1.msra.mxu0 0.0
        %469 = vmatprep.subr.mxu0 0.0
        %470 = vmatpush1.msra.mxu0 0.0
        %471 = vmatprep.subr.mxu0 0.0
        %472 = vmatpush1.msra.mxu0 0.0
        %473 = vmatprep.subr.mxu0 0.0
        %v474 = vand.u32 %v164, 4294901760
        %475 = vmatpush1.msra.mxu0 %v474
        %476 = vmatprep.subr.mxu0 0.0
        %v477 = vand.u32 %v163, 4294901760
        %478 = vmatpush1.msra.mxu0 %v477
        %479 = vmatprep.subr.mxu0 0.0
        %v480 = vand.u32 %v162, 4294901760
        %481 = vmatpush1.msra.mxu0 %v480
        %482 = vmatprep.subr.mxu0 0.0
        %v483 = vand.u32 %v161, 4294901760
        %484 = vmatpush1.msra.mxu0 %v483
        %485 = vmatprep.subr.mxu0 0.0
        %v486 = vand.u32 %v160, 4294901760
        %487 = vmatpush1.msra.mxu0 %v486
        %488 = vmatprep.subr.mxu0 0.0
        %v489 = vand.u32 %v159, 4294901760
        %490 = vmatpush1.msra.mxu0 %v489
        %491 = vmatprep.subr.mxu0 0.0
        %v492 = vand.u32 %v158, 4294901760
        %493 = vmatpush1.msra.mxu0 %v492
        %494 = vmatprep.subr.mxu0 0.0
        %v495 = vand.u32 %v157, 4294901760
        %496 = vmatpush1.msra.mxu0 %v495
        %497 = vmatprep.subr.mxu0 0.0
        %498 = vmatpush2.msra.mxu0 0.0
        %499 = vmatprep.subr.mxu0 0.0
        %500 = vmatpush2.msra.mxu0 0.0
        %501 = vmatprep.subr.mxu0 0.0
        %502 = vmatpush2.msra.mxu0 0.0
        %503 = vmatprep.subr.mxu0 0.0
        %504 = vmatpush2.msra.mxu0 0.0
        %505 = vmatprep.subr.mxu0 0.0
        %506 = vmatpush2.msra.mxu0 0.0
        %507 = vmatprep.subr.mxu0 0.0
        %508 = vmatpush2.msra.mxu0 0.0
        %509 = vmatprep.subr.mxu0 0.0
        %510 = vmatpush2.msra.mxu0 0.0
        %511 = vmatprep.subr.mxu0 0.0
        %512 = vmatpush2.msra.mxu0 0.0
        %513 = vmatprep.subr.mxu0 0.0
        %514 = vmatpush2.msra.mxu0 0.0
        %515 = vmatprep.subr.mxu0 0.0
        %516 = vmatpush2.msra.mxu0 0.0
        %517 = vmatprep.subr.mxu0 0.0
        %518 = vmatpush2.msra.mxu0 0.0
        %519 = vmatprep.subr.mxu0 0.0
        %520 = vmatpush2.msra.mxu0 0.0
        %521 = vmatprep.subr.mxu0 0.0
        %522 = vmatpush2.msra.mxu0 0.0
        %523 = vmatprep.subr.mxu0 0.0
        %524 = vmatpush2.msra.mxu0 0.0
        %525 = vmatprep.subr.mxu0 0.0
        %526 = vmatpush2.msra.mxu0 0.0
        %527 = vmatprep.subr.mxu0 0.0
        %528 = vmatpush2.msra.mxu0 0.0
        %529 = vmatprep.mubr.f32.mxu0 0.0
        %v530 = vand.u32 %v173, 4294901760
        %v531 = vsub.f32 %v173, %v530
        %v532 = vand.u32 %v531, 4294901760
        %533 = vmatmul.mubr.f32.gmra.mxu0 %v532
        %v534 = vpop.f32.mrf.mxu0
        %v535 = vadd.f32 %v454, %v534
        %v536 = vpop.f32.mrf.mxu0
        %537 = vdwg.mxu0
        %538 = vmatprep.subr.mxu0 0.0
        %539 = vmatpush1.msra.mxu0 0.0
        %540 = vmatprep.subr.mxu0 0.0
        %541 = vmatpush1.msra.mxu0 0.0
        %542 = vmatprep.subr.mxu0 0.0
        %543 = vmatpush1.msra.mxu0 0.0
        %544 = vmatprep.subr.mxu0 0.0
        %545 = vmatpush1.msra.mxu0 0.0
        %546 = vmatprep.subr.mxu0 0.0
        %547 = vmatpush1.msra.mxu0 0.0
        %548 = vmatprep.subr.mxu0 0.0
        %549 = vmatpush1.msra.mxu0 0.0
        %550 = vmatprep.subr.mxu0 0.0
        %551 = vmatpush1.msra.mxu0 0.0
        %552 = vmatprep.subr.mxu0 0.0
        %553 = vmatpush1.msra.mxu0 0.0
        %554 = vmatprep.subr.mxu0 0.0
        %v555 = vand.u32 %v164, 4294901760
        %v556 = vsub.f32 %v164, %v555
        %v557 = vand.u32 %v556, 4294901760
        %558 = vmatpush1.msra.mxu0 %v557
        %559 = vmatprep.subr.mxu0 0.0
        %v560 = vand.u32 %v163, 4294901760
        %v561 = vsub.f32 %v163, %v560
        %v562 = vand.u32 %v561, 4294901760
        %563 = vmatpush1.msra.mxu0 %v562
        %564 = vmatprep.subr.mxu0 0.0
        %v565 = vand.u32 %v162, 4294901760
        %v566 = vsub.f32 %v162, %v565
        %v567 = vand.u32 %v566, 4294901760
        %568 = vmatpush1.msra.mxu0 %v567
        %569 = vmatprep.subr.mxu0 0.0
        %v570 = vand.u32 %v161, 4294901760
        %v571 = vsub.f32 %v161, %v570
        %v572 = vand.u32 %v571, 4294901760
        %573 = vmatpush1.msra.mxu0 %v572
        %574 = vmatprep.subr.mxu0 0.0
        %v575 = vand.u32 %v160, 4294901760
        %v576 = vsub.f32 %v160, %v575
        %v577 = vand.u32 %v576, 4294901760
        %578 = vmatpush1.msra.mxu0 %v577
        %579 = vmatprep.subr.mxu0 0.0
        %v580 = vand.u32 %v159, 4294901760
        %v581 = vsub.f32 %v159, %v580
        %v582 = vand.u32 %v581, 4294901760
        %583 = vmatpush1.msra.mxu0 %v582
        %584 = vmatprep.subr.mxu0 0.0
        %v585 = vand.u32 %v158, 4294901760
        %v586 = vsub.f32 %v158, %v585
        %v587 = vand.u32 %v586, 4294901760
        %588 = vmatpush1.msra.mxu0 %v587
        %589 = vmatprep.subr.mxu0 0.0
        %v590 = vand.u32 %v157, 4294901760
        %v591 = vsub.f32 %v157, %v590
        %v592 = vand.u32 %v591, 4294901760
        %593 = vmatpush1.msra.mxu0 %v592
        %594 = vmatprep.subr.mxu0 0.0
        %595 = vmatpush2.msra.mxu0 0.0
        %596 = vmatprep.subr.mxu0 0.0
        %597 = vmatpush2.msra.mxu0 0.0
        %598 = vmatprep.subr.mxu0 0.0
        %599 = vmatpush2.msra.mxu0 0.0
        %600 = vmatprep.subr.mxu0 0.0
        %601 = vmatpush2.msra.mxu0 0.0
        %602 = vmatprep.subr.mxu0 0.0
        %603 = vmatpush2.msra.mxu0 0.0
        %604 = vmatprep.subr.mxu0 0.0
        %605 = vmatpush2.msra.mxu0 0.0
        %606 = vmatprep.subr.mxu0 0.0
        %607 = vmatpush2.msra.mxu0 0.0
        %608 = vmatprep.subr.mxu0 0.0
        %609 = vmatpush2.msra.mxu0 0.0
        %610 = vmatprep.subr.mxu0 0.0
        %611 = vmatpush2.msra.mxu0 0.0
        %612 = vmatprep.subr.mxu0 0.0
        %613 = vmatpush2.msra.mxu0 0.0
        %614 = vmatprep.subr.mxu0 0.0
        %615 = vmatpush2.msra.mxu0 0.0
        %616 = vmatprep.subr.mxu0 0.0
        %617 = vmatpush2.msra.mxu0 0.0
        %618 = vmatprep.subr.mxu0 0.0
        %619 = vmatpush2.msra.mxu0 0.0
        %620 = vmatprep.subr.mxu0 0.0
        %621 = vmatpush2.msra.mxu0 0.0
        %622 = vmatprep.subr.mxu0 0.0
        %623 = vmatpush2.msra.mxu0 0.0
        %624 = vmatprep.subr.mxu0 0.0
        %625 = vmatpush2.msra.mxu0 0.0
        %626 = vmatprep.mubr.f32.mxu0 0.0
        %v627 = vand.u32 %v173, 4294901760
        %628 = vmatmul.mubr.f32.gmra.mxu0 %v627
        %v629 = vpop.f32.mrf.mxu0
        %v630 = vadd.f32 %v535, %v629
        %v631 = vpop.f32.mrf.mxu0
        %632 = vdwg.mxu0
        %633 = vmatprep.subr.mxu0 0.0
        %634 = vmatpush1.msra.mxu0 0.0
        %635 = vmatprep.subr.mxu0 0.0
        %636 = vmatpush1.msra.mxu0 0.0
        %637 = vmatprep.subr.mxu0 0.0
        %638 = vmatpush1.msra.mxu0 0.0
        %639 = vmatprep.subr.mxu0 0.0
        %640 = vmatpush1.msra.mxu0 0.0
        %641 = vmatprep.subr.mxu0 0.0
        %642 = vmatpush1.msra.mxu0 0.0
        %643 = vmatprep.subr.mxu0 0.0
        %644 = vmatpush1.msra.mxu0 0.0
        %645 = vmatprep.subr.mxu0 0.0
        %646 = vmatpush1.msra.mxu0 0.0
        %647 = vmatprep.subr.mxu0 0.0
        %648 = vmatpush1.msra.mxu0 0.0
        %649 = vmatprep.subr.mxu0 0.0
        %v650 = vand.u32 %v164, 4294901760
        %651 = vmatpush1.msra.mxu0 %v650
        %652 = vmatprep.subr.mxu0 0.0
        %v653 = vand.u32 %v163, 4294901760
        %654 = vmatpush1.msra.mxu0 %v653
        %655 = vmatprep.subr.mxu0 0.0
        %v656 = vand.u32 %v162, 4294901760
        %657 = vmatpush1.msra.mxu0 %v656
        %658 = vmatprep.subr.mxu0 0.0
        %v659 = vand.u32 %v161, 4294901760
        %660 = vmatpush1.msra.mxu0 %v659
        %661 = vmatprep.subr.mxu0 0.0
        %v662 = vand.u32 %v160, 4294901760
        %663 = vmatpush1.msra.mxu0 %v662
        %664 = vmatprep.subr.mxu0 0.0
        %v665 = vand.u32 %v159, 4294901760
        %666 = vmatpush1.msra.mxu0 %v665
        %667 = vmatprep.subr.mxu0 0.0
        %v668 = vand.u32 %v158, 4294901760
        %669 = vmatpush1.msra.mxu0 %v668
        %670 = vmatprep.subr.mxu0 0.0
        %v671 = vand.u32 %v157, 4294901760
        %672 = vmatpush1.msra.mxu0 %v671
        %673 = vmatprep.subr.mxu0 0.0
        %674 = vmatpush2.msra.mxu0 0.0
        %675 = vmatprep.subr.mxu0 0.0
        %676 = vmatpush2.msra.mxu0 0.0
        %677 = vmatprep.subr.mxu0 0.0
        %678 = vmatpush2.msra.mxu0 0.0
        %679 = vmatprep.subr.mxu0 0.0
        %680 = vmatpush2.msra.mxu0 0.0
        %681 = vmatprep.subr.mxu0 0.0
        %682 = vmatpush2.msra.mxu0 0.0
        %683 = vmatprep.subr.mxu0 0.0
        %684 = vmatpush2.msra.mxu0 0.0
        %685 = vmatprep.subr.mxu0 0.0
        %686 = vmatpush2.msra.mxu0 0.0
        %687 = vmatprep.subr.mxu0 0.0
        %688 = vmatpush2.msra.mxu0 0.0
        %689 = vmatprep.subr.mxu0 0.0
        %690 = vmatpush2.msra.mxu0 0.0
        %691 = vmatprep.subr.mxu0 0.0
        %692 = vmatpush2.msra.mxu0 0.0
        %693 = vmatprep.subr.mxu0 0.0
        %694 = vmatpush2.msra.mxu0 0.0
        %695 = vmatprep.subr.mxu0 0.0
        %696 = vmatpush2.msra.mxu0 0.0
        %697 = vmatprep.subr.mxu0 0.0
        %698 = vmatpush2.msra.mxu0 0.0
        %699 = vmatprep.subr.mxu0 0.0
        %700 = vmatpush2.msra.mxu0 0.0
        %701 = vmatprep.subr.mxu0 0.0
        %702 = vmatpush2.msra.mxu0 0.0
        %703 = vmatprep.subr.mxu0 0.0
        %704 = vmatpush2.msra.mxu0 0.0
        %705 = vmatprep.mubr.f32.mxu0 0.0
        %v706 = vand.u32 %v173, 4294901760
        %707 = vmatmul.mubr.f32.gmra.mxu0 %v706
        %v708 = vpop.f32.mrf.mxu0
        %v709 = vadd.f32 %v630, %v708
        %v710 = vpop.f32.mrf.mxu0
        %711 = vdwg.mxu0
        %712 = vst [vmem:[%s149] sm:$0xff] %v709
        %s713 = sand.u32 %s72, 1
        %s714 = scalar_lea.sflag [#allocation4], %s713
        %s715 = sand.u32 %s72, 1
        %s716 = smul.addr %s715, 8
        %s717 = scalar_lea.vmem [#allocation5], %s716
        // Predicated region
        $region33: #{tpu_custom_call.1} parent=27 // pred_check
          %p718 = pneg %p82
        $region34: #{tpu_custom_call.1} parent=27 // pred_check_branch
          %720 = sbr.rel (%p718) target = $region36
        $region35: #{tpu_custom_call.1} parent=27 // pred_region
          %s722 = ssub.s32 128, 128
          %723 = vsyncadd %s714, %s722
          %s724 = smul.addr %s17, 128
          %s725 = scalar_lea.hbm %s2, %s724
          %s727 = sshll.u32 %s717, 4
          %s728 = int_to_ptr.vmem [resolvable:$true] %s727
          %730 = dma.vmem_to_hbm [thread:$0]  %s728, 128, %s725, %s714
        $region36: #{tpu_custom_call.1} parent=27 // pred_fallthru
          _
      $region28: #{tpu_custom_call.1} parent=5 // pred_fallthru
        _
      %p731 = scmp.le.s32.totalorder 2, %s12
      // Predicated region
      $region37: #{tpu_custom_call.1} parent=5 // pred_check
        %p732 = pneg %p731
      $region38: #{tpu_custom_call.1} parent=5 // pred_check_branch
        %734 = sbr.rel (%p732) target = $region40
      $region39: #{tpu_custom_call.1} parent=5 // pred_region
        %s735 = ssub.s32 %s12, 2
        // Predicated region
        $region41: #{tpu_custom_call.1} parent=39 // pred_check
          %p736 = pneg %p88
        $region42: #{tpu_custom_call.1} parent=39 // pred_check_branch
          %738 = sbr.rel (%p736) target = $region44
        $region43: #{tpu_custom_call.1} parent=39 // pred_region
          %s739 = sand.u32 %s73, 1
          %s740 = scalar_lea.sflag [#allocation4], %s739
          %s741 = sand.u32 %s73, 1
          %s742 = smul.addr %s741, 8
          %s743 = scalar_lea.vmem [#allocation5], %s742
          %744 = dma.done %s740, 128
        $region44: #{tpu_custom_call.1} parent=39 // pred_fallthru
          _
      $region40: #{tpu_custom_call.1} parent=5 // pred_fallthru
        _
    $region6: #{tpu_custom_call.1} parent=1 // loop_footer
      %s16 = sadd.s32 1, %s12
    $region7: #{tpu_custom_call.1} parent=1 // loop_footer_branch
      %11 = sbr.rel target = $region3
    $region8: #{tpu_custom_call.1} parent=1 // loop_exit
      _
    %745 = vsyncpa [#allocation3], 1
    %s746 = scalar_lea.sflag [#allocation3], 1
    %747 = vsyncpa %s746, 1
    %748 = vsyncpa [#allocation4], 1
    %s749 = scalar_lea.sflag [#allocation4], 1
    %750 = vsyncpa %s749, 1

</llo_original>
